<compile_context>
chip_gen: v7x
topology: tpu7x:2x2x1
jax: 0.10.0
libtpu: 0.0.40
codegen_flags: <defaults>
</compile_context>

<pallas_src>
import functools

import jax
import jax.numpy as jnp
from jax import lax
from jax.experimental import pallas as pl
from jax.experimental.pallas import tpu as pltpu

MAX_K = 10.0    # max_K in the PyTorch module
EPS = 1e-12

# contract the last (K) dim of both operands: (.., K) x (M, K) -> (.., M)
_DN_LAST = (((1,), (1,)), ((), ()))

_VMEM = pl.BlockSpec(memory_space=pltpu.MemorySpace.VMEM)
_SMEM = pl.BlockSpec(memory_space=pltpu.MemorySpace.SMEM)

# Conservative per-pass VMEM budget: fits v5e's 16 MiB scoped default without
# raising vmem_limit_bytes; v6e (32 MiB) and v7x (32 MiB scoped / 64 physical)
# have headroom.
_STREAM_VMEM_BUDGET = 12 * 2**20
# Below this W footprint the single-launch fused kernel wins outright.
_FAST_PATH_W_BYTES = 2 * 2**20


# ---------------------------------------------------------------------------
# Fast path: whole forward in one un-gridded kernel (small layers).
# W is read from HBM exactly once; 1 launch instead of 3-4.
# ---------------------------------------------------------------------------
def _fused_small_kernel(factor_ref, u_ref, x_ref, w_ref, b_ref,
                        y_ref, u_out_ref, v_out_ref, sigma_ref):
    w = w_ref[...]                                        # (M, K)
    u = u_ref[...].astype(w.dtype)                        # (1, M)
    # v = normalize(W^T u):  (1, M) @ (M, K) -> (1, K)
    v_raw = jnp.dot(u, w, preferred_element_type=jnp.float32)
    v_norm = jnp.sqrt(jnp.sum(v_raw * v_raw, keepdims=True))
    v = v_raw / (v_norm + EPS)
    v_out_ref[...] = v
    # u_ = W v:  (1, K) x (M, K) -> (1, M)
    u_raw = lax.dot_general(v.astype(w.dtype), w, _DN_LAST,
                            preferred_element_type=jnp.float32)
    sq = jnp.sum(u_raw * u_raw, keepdims=True)            # (1, 1)
    inv_norm = 1.0 / (jnp.sqrt(sq) + EPS)
    u_out_ref[...] = u_raw * inv_norm
    sigma = sq * inv_norm                                  # == u_new . (W v)
    sigma_ref[...] = sigma
    gain = factor_ref[0] / sigma                           # (1, 1)
    # y = gain * (x @ W^T) + b   (W_eff never materialized)
    y_raw = lax.dot_general(x_ref[...], w, _DN_LAST,
                            preferred_element_type=jnp.float32)
    y_ref[...] = (gain * y_raw + b_ref[...]).astype(y_ref.dtype)


# ---------------------------------------------------------------------------
# Streaming path (large layers): two streamed reads of W total.
# ---------------------------------------------------------------------------
def _pass1_kernel(u_ref, x_ref, w_ref, v_ref, y_raw_ref):
    """First W stream (per M-tile): accumulate v_raw = W^T u (reduction over M,
    resident (1, K) output) AND emit the y_raw = x @ W^T tile — the GEMM is
    independent of v, so it rides this stream for free."""
    m = pl.program_id(0)

    @pl.when(m == 0)
    def _():
        v_ref[...] = jnp.zeros_like(v_ref)

    w = w_ref[...]                                        # (tm, K)
    u_blk = u_ref[...].astype(w.dtype)                    # (1, tm)
    # (1, tm) @ (tm, K) -> (1, K)
    v_ref[...] += jnp.dot(u_blk, w, preferred_element_type=jnp.float32)
    # (B, K) x (tm, K) -> (B, tm)
    y_raw_ref[...] = lax.dot_general(x_ref[...], w, _DN_LAST,
                                     preferred_element_type=jnp.float32)

    @pl.when(m == pl.num_programs(0) - 1)
    def _():
        v_acc = v_ref[...]
        norm = jnp.sqrt(jnp.sum(v_acc * v_acc, keepdims=True))
        v_ref[...] = v_acc / (norm + EPS)


def _pass2_kernel(v_ref, w_ref, u_raw_ref):
    """Second (and last) W stream: u_raw = W v, per M-tile (pure matvec)."""
    w = w_ref[...]                                        # (tm, K)
    v = v_ref[...].astype(w.dtype)                        # (1, K)
    u_raw_ref[...] = lax.dot_general(v, w, _DN_LAST,
                                     preferred_element_type=jnp.float32)


def _sigma_kernel(factor_ref, u_raw_ref, u_out_ref, gain_ref, sigma_ref):
    """O(M) epilogue: normalize u, sigma = ||Wv||^2/(||Wv||+eps),
    gain = max_K*sigmoid(scale)/sigma (fed to the y epilogue as a (1,1))."""
    u_raw = u_raw_ref[...]                                # (1, M) f32
    sq = jnp.sum(u_raw * u_raw, keepdims=True)            # (1, 1)
    inv_norm = 1.0 / (jnp.sqrt(sq) + EPS)
    u_out_ref[...] = u_raw * inv_norm
    sigma = sq * inv_norm
    sigma_ref[...] = sigma
    gain_ref[...] = factor_ref[0] / sigma


def _scale_bias_kernel(gain_ref, y_raw_ref, b_ref, y_ref):
    """y = gain * y_raw + b, tiled over M; y_raw's HBM buffer is reused for y
    via input_output_aliases, so this adds no extra B*M allocation."""
    y_ref[...] = (gain_ref[...] * y_raw_ref[...] + b_ref[...]).astype(y_ref.dtype)


# ---------------------------------------------------------------------------
# Wrapper
# ---------------------------------------------------------------------------
def _pick_block_m(M, K, B, w_itemsize, x_itemsize):
    """Largest MXU-friendly M-tile whose streamed working set fits a
    conservative (v5e-safe) VMEM budget. Returns None if M has no aligned tile."""
    for bm in (1024, 512, 256, 128):
        if M % bm:
            continue
        need = (2 * bm * K * w_itemsize     # W tile, double-buffered
                + 2 * B * K * x_itemsize    # x (constant index; see TODO below)
                + 2 * B * bm * 4            # y_raw tile, double-buffered
                + 2 * bm * 4                # u tile
                + K * 4)                    # resident v accumulator
        if need <= _STREAM_VMEM_BUDGET:
            return bm
    return None


def spectral_norm_linear(x, w, u, b, scale, *, block_m=None,
                         mxu_dtype=jnp.float32):
    """Forward of SpectralNorm(nn.Linear(K, M)) in training mode (n_iter=1).

    x: (B, K), w: (M, K) [weight_bar], u: (M,), b: (M,), scale: scalar.
    Returns (y, u_new, v_new, sigma).

    mxu_dtype=jnp.bfloat16 halves the dominant HBM/VMEM traffic of the W/x
    streams (accumulation stays f32); the default is f32 for exact parity.
    """
    B, K = x.shape
    M, Kw = w.shape
    assert K == Kw

    wf = w.astype(mxu_dtype)
    xf = x.astype(mxu_dtype)
    u2 = u.reshape(1, M).astype(jnp.float32)
    b2 = b.reshape(1, M).astype(jnp.float32)
    # max_K * sigmoid(scale) is a single scalar op on a parameter; compute it
    # outside and feed it through SMEM so the kernel's scalar path stays clean.
    factor = (MAX_K * jax.nn.sigmoid(jnp.asarray(scale, jnp.float32))).reshape(1)
    itemsize = jnp.dtype(mxu_dtype).itemsize

    if block_m is None:
        block_m = _pick_block_m(M, K, B, itemsize, itemsize)
        use_stream = (block_m is not None) and (M * K * itemsize > _FAST_PATH_W_BYTES)
    else:
        assert M % block_m == 0, "explicit block_m must divide M"
        use_stream = True

    if not use_stream:
        # ---- fast path: one launch, W read once -----------------------------
        # TODO(synk): very large layers whose M is not a multiple of 128 would
        # need padding/masking instead of this whole-array fallback.
        y, u_new, v_new, sigma = pl.pallas_call(
            _fused_small_kernel,
            out_shape=(
                jax.ShapeDtypeStruct((B, M), jnp.float32),   # y
                jax.ShapeDtypeStruct((1, M), jnp.float32),   # updated u buffer
                jax.ShapeDtypeStruct((1, K), jnp.float32),   # updated v buffer
                jax.ShapeDtypeStruct((1, 1), jnp.float32),   # sigma
            ),
            in_specs=[_SMEM, _VMEM, _VMEM, _VMEM, _VMEM],
            out_specs=(_VMEM, _VMEM, _VMEM, _VMEM),
        )(factor, u2, xf, wf, b2)
        return y, u_new[0], v_new[0], sigma[0, 0]

    n_m = M // block_m
    # Raise the scoped-VMEM limit only when an explicit large block_m outgrows
    # the conservative default budget (covers v5e's 16 MiB scoped default).
    need = (2 * block_m * K * itemsize + 2 * B * K * itemsize
            + 2 * B * block_m * 4 + 2 * block_m * 4 + K * 4)
    vmem_limit = int(min(2 * need, 64 * 2**20)) if need > _STREAM_VMEM_BUDGET else None

    # ---- pass 1 over W: v = normalize(W^T u)  AND  y_raw = x @ W^T ----------
    # (M is the reduction axis for v -> "arbitrary"; y_raw tiles fall out of
    #  the same W stream at zero extra HBM cost.)
    # TODO(synk): x/v have constant block indices; pipeline_mode=pl.Buffered(1)
    # would reclaim their second VMEM buffer (matters most on v7x's 64 MiB).
    v, y_raw = pl.pallas_call(
        _pass1_kernel,
        out_shape=(
            jax.ShapeDtypeStruct((1, K), jnp.float32),
            jax.ShapeDtypeStruct((B, M), jnp.float32),
        ),
        grid=(n_m,),
        in_specs=[
            pl.BlockSpec((1, block_m), lambda m: (0, m)),    # u tile
            pl.BlockSpec((B, K), lambda m: (0, 0)),          # x (resident)
            pl.BlockSpec((block_m, K), lambda m: (m, 0)),    # W tile (streamed)
        ],
        out_specs=(
            pl.BlockSpec((1, K), lambda m: (0, 0)),          # v accumulator (resident)
            pl.BlockSpec((B, block_m), lambda m: (0, m)),    # y_raw tile
        ),
        compiler_params=pltpu.CompilerParams(
            dimension_semantics=("arbitrary",),
            vmem_limit_bytes=vmem_limit),
    )(u2, xf, wf)

    # ---- pass 2 over W: u_ = W v (pure matvec) -------------------------------
    # TODO(synk): pltpu.CORE_PARALLEL on this axis is the lever that engages the
    # second TensorCore on v7x; kept portable ("parallel") here.
    u_raw = pl.pallas_call(
        _pass2_kernel,
        out_shape=jax.ShapeDtypeStruct((1, M), jnp.float32),
        grid=(n_m,),
        in_specs=[
            pl.BlockSpec((1, K), lambda m: (0, 0)),          # v (resident)
            pl.BlockSpec((block_m, K), lambda m: (m, 0)),    # W tile (streamed)
        ],
        out_specs=pl.BlockSpec((1, block_m), lambda m: (0, m)),
        compiler_params=pltpu.CompilerParams(
            dimension_semantics=("parallel",),
            vmem_limit_bytes=vmem_limit),
    )(v, wf)

    # ---- tiny O(M) epilogue: u normalization, sigma, scalar gain ------------
    u_new, gain, sigma = pl.pallas_call(
        _sigma_kernel,
        out_shape=(
            jax.ShapeDtypeStruct((1, M), jnp.float32),
            jax.ShapeDtypeStruct((1, 1), jnp.float32),
            jax.ShapeDtypeStruct((1, 1), jnp.float32),
        ),
        in_specs=[_SMEM, _VMEM],
        out_specs=(_VMEM, _VMEM, _VMEM),
    )(factor, u_raw)

    # ---- y epilogue: gridded over M, y_raw aliased to y (in-place) ----------
    y = pl.pallas_call(
        _scale_bias_kernel,
        out_shape=jax.ShapeDtypeStruct((B, M), jnp.float32),
        grid=(n_m,),
        in_specs=[
            pl.BlockSpec((1, 1), lambda m: (0, 0)),          # gain (resident scalar)
            pl.BlockSpec((B, block_m), lambda m: (0, m)),    # y_raw tile
            pl.BlockSpec((1, block_m), lambda m: (0, m)),    # bias tile
        ],
        out_specs=pl.BlockSpec((B, block_m), lambda m: (0, m)),
        input_output_aliases={1: 0},                         # reuse y_raw's buffer for y
        compiler_params=pltpu.CompilerParams(
            dimension_semantics=("parallel",)),
    )(gain, y_raw, b2)

    # TODO(synk): power_iterations > 1 would repeat the v/u passes; the module
    # default (n_iter=1) is what is implemented here.
    return y, u_new[0], v[0], sigma[0, 0]


def _reference(x, w, u, b, scale):
    """Pure-JAX reference of the same semantics (PyTorch power_iteration + Linear)."""
    with jax.default_matmul_precision("highest"):
        v_ = w.T @ u
        v = v_ / (jnp.linalg.norm(v_) + EPS)
        u_ = w @ v
        u_n = u_ / (jnp.linalg.norm(u_) + EPS)
        sigma = u_n @ (w @ v)
        factor = MAX_K * jax.nn.sigmoid(scale)
        y = (factor / sigma) * (x @ w.T) + b
    return y, u_n, v, sigma


if __name__ == "__main__":
    key = jax.random.PRNGKey(0)

    # ---- small layer (fast path: single fused launch, W read once) ----------
    B, IN_F, OUT_F = 8, 32, 16          # wrapped module: nn.Linear(32, 16)
    kx, kw, ku, kb, k2 = jax.random.split(key, 5)
    x = jax.random.normal(kx, (B, IN_F), jnp.float32)
    w = jax.random.normal(kw, (OUT_F, IN_F), jnp.float32) * 0.1   # weight_bar
    b = jax.random.normal(kb, (OUT_F,), jnp.float32) * 0.1        # linear bias
    u0 = jax.random.normal(ku, (OUT_F,), jnp.float32)             # u buffer init
    u0 = u0 / (jnp.linalg.norm(u0) + EPS)
    scale = jnp.float32(0.0)   # torch.zeros(1) -> factor = 10*sigmoid(0) = 5

    sn_small = jax.jit(spectral_norm_linear)
    y, u_new, v_new, sigma = sn_small(x, w, u0, b, scale)
    jax.block_until_ready(y)

    y_r, u_r, v_r, s_r = _reference(x, w, u0, b, scale)
    assert jnp.allclose(y, y_r, atol=1e-4, rtol=1e-4), "y mismatch (fast path)"
    assert jnp.allclose(u_new, u_r, atol=1e-4, rtol=1e-4), "u mismatch (fast path)"
    assert jnp.allclose(v_new, v_r, atol=1e-4, rtol=1e-4), "v mismatch (fast path)"
    assert jnp.allclose(sigma, s_r, atol=1e-4, rtol=1e-4), "sigma mismatch (fast path)"

    # ---- larger layer (streaming path: gridded passes + aliased epilogue) ---
    B2, IN2, OUT2 = 16, 256, 512
    kx2, kw2, ku2, kb2 = jax.random.split(k2, 4)
    x2 = jax.random.normal(kx2, (B2, IN2), jnp.float32)
    w2 = jax.random.normal(kw2, (OUT2, IN2), jnp.float32) * 0.05
    b2 = jax.random.normal(kb2, (OUT2,), jnp.float32) * 0.1
    u20 = jax.random.normal(ku2, (OUT2,), jnp.float32)
    u20 = u20 / (jnp.linalg.norm(u20) + EPS)

    sn_stream = jax.jit(functools.partial(spectral_norm_linear, block_m=256))
    y2, u2_new, v2_new, sigma2 = sn_stream(x2, w2, u20, b2, scale)
    jax.block_until_ready(y2)

    y2_r, u2_r, v2_r, s2_r = _reference(x2, w2, u20, b2, scale)
    assert jnp.allclose(y2, y2_r, atol=1e-3, rtol=1e-3), "y mismatch (streaming)"
    assert jnp.allclose(u2_new, u2_r, atol=1e-3, rtol=1e-3), "u mismatch (streaming)"
    assert jnp.allclose(v2_new, v2_r, atol=1e-3, rtol=1e-3), "v mismatch (streaming)"
    assert jnp.allclose(sigma2, s2_r, atol=1e-3, rtol=1e-3), "sigma mismatch (streaming)"

    # ---- bf16 W/x streams (halves HBM traffic; f32 accumulation kept) -------
    sn_bf16 = jax.jit(functools.partial(spectral_norm_linear, block_m=256,
                                        mxu_dtype=jnp.bfloat16))
    y3, _, _, sigma3 = sn_bf16(x2, w2, u20, b2, scale)
    jax.block_until_ready(y3)
    assert jnp.allclose(y3, y2_r, atol=0.25, rtol=0.1), "y mismatch (bf16 stream)"
    assert jnp.allclose(sigma3, s2_r, atol=0.02, rtol=0.03), "sigma mismatch (bf16 stream)"

    print("KERNEL_OK")
</pallas_src>

<mosaic_0001>
module attributes {stable_mosaic.version = 11 : i64} {
  func.func @_fused_small_kernel(%arg0: memref<1xf32, #tpu.memory_space<smem>>, %arg1: memref<1x16xf32, #tpu.memory_space<vmem>>, %arg2: memref<8x32xf32, #tpu.memory_space<vmem>>, %arg3: memref<16x32xf32, #tpu.memory_space<vmem>>, %arg4: memref<1x16xf32, #tpu.memory_space<vmem>>, %arg5: memref<8x16xf32, #tpu.memory_space<vmem>>, %arg6: memref<1x16xf32, #tpu.memory_space<vmem>>, %arg7: memref<1x32xf32, #tpu.memory_space<vmem>>, %arg8: memref<1x1xf32, #tpu.memory_space<vmem>>) attributes {dimension_semantics = [], scalar_prefetch = 0 : i64, scratch_operands = 0 : i64, tpu.core_type = #tpu.core_type<tc>} {
    %c0 = arith.constant 0 : index
    %c0_0 = arith.constant 0 : index
    %0 = vector.load %arg3[%c0, %c0_0] : memref<16x32xf32, #tpu.memory_space<vmem>>, vector<16x32xf32>
    %c0_1 = arith.constant 0 : index
    %c0_2 = arith.constant 0 : index
    %1 = vector.load %arg1[%c0_1, %c0_2] : memref<1x16xf32, #tpu.memory_space<vmem>>, vector<1x16xf32>
    %cst = arith.constant dense<0.000000e+00> : vector<1x32xf32>
    %2 = tpu.matmul %1, %0, %cst {dimension_numbers = #tpu.dot_dimension_numbers<[1], [0], [0], [1], [0, 0, 1, 1], [], []>} : vector<1x16xf32>, vector<16x32xf32>, vector<1x32xf32> -> vector<1x32xf32>
    %3 = arith.mulf %2, %2 : vector<1x32xf32>
    %4 = vector.shape_cast %3 : vector<1x32xf32> to vector<1x1x32xf32>
    %cst_3 = arith.constant dense<0.000000e+00> : vector<1xf32>
    %5 = vector.multi_reduction <add>, %4, %cst_3 [1, 2] : vector<1x1x32xf32> to vector<1xf32>
    %6 = vector.shape_cast %5 : vector<1xf32> to vector<1x1x1xf32>
    %7 = vector.extract %6[0, 0, 0] : f32 from vector<1x1x1xf32>
    %8 = vector.broadcast %7 : f32 to vector<1x1xf32>
    %9 = math.sqrt %8 : vector<1x1xf32>
    %cst_4 = arith.constant 9.99999996E-13 : f32
    %10 = vector.broadcast %cst_4 : f32 to vector<1x1xf32>
    %11 = arith.addf %9, %10 : vector<1x1xf32>
    %12 = vector.broadcast %11 : vector<1x1xf32> to vector<1x32xf32>
    %13 = arith.divf %2, %12 : vector<1x32xf32>
    %c0_5 = arith.constant 0 : index
    %c0_6 = arith.constant 0 : index
    %14 = vector.load %arg7[%c0_5, %c0_6] : memref<1x32xf32, #tpu.memory_space<vmem>>, vector<1x32xf32>
    tpu.vector_store %arg7[%c0_5, %c0_6], %13 {strides = array<i32>} : memref<1x32xf32, #tpu.memory_space<vmem>>, vector<1x32xf32>,
    %cst_7 = arith.constant dense<0.000000e+00> : vector<1x16xf32>
    %15 = tpu.matmul %13, %0, %cst_7 {dimension_numbers = #tpu.dot_dimension_numbers<[1], [1], [0], [0], [0, 0, 1, 0], [], []>} : vector<1x32xf32>, vector<16x32xf32>, vector<1x16xf32> -> vector<1x16xf32>
    %16 = arith.mulf %15, %15 : vector<1x16xf32>
    %17 = vector.shape_cast %16 : vector<1x16xf32> to vector<1x1x16xf32>
    %cst_8 = arith.constant dense<0.000000e+00> : vector<1xf32>
    %18 = vector.multi_reduction <add>, %17, %cst_8 [1, 2] : vector<1x1x16xf32> to vector<1xf32>
    %19 = vector.shape_cast %18 : vector<1xf32> to vector<1x1x1xf32>
    %20 = vector.extract %19[0, 0, 0] : f32 from vector<1x1x1xf32>
    %21 = vector.broadcast %20 : f32 to vector<1x1xf32>
    %22 = math.sqrt %21 : vector<1x1xf32>
    %cst_9 = arith.constant 9.99999996E-13 : f32
    %23 = vector.broadcast %cst_9 : f32 to vector<1x1xf32>
    %24 = arith.addf %22, %23 : vector<1x1xf32>
    %cst_10 = arith.constant 1.000000e+00 : f32
    %25 = vector.broadcast %cst_10 : f32 to vector<1x1xf32>
    %26 = arith.divf %25, %24 : vector<1x1xf32>
    %27 = vector.broadcast %26 : vector<1x1xf32> to vector<1x16xf32>
    %28 = arith.mulf %15, %27 : vector<1x16xf32>
    %c0_11 = arith.constant 0 : index
    %c0_12 = arith.constant 0 : index
    %29 = vector.load %arg6[%c0_11, %c0_12] : memref<1x16xf32, #tpu.memory_space<vmem>>, vector<1x16xf32>
    tpu.vector_store %arg6[%c0_11, %c0_12], %28 {strides = array<i32>} : memref<1x16xf32, #tpu.memory_space<vmem>>, vector<1x16xf32>,
    %30 = arith.mulf %21, %26 : vector<1x1xf32>
    %c0_13 = arith.constant 0 : index
    %c0_14 = arith.constant 0 : index
    %31 = vector.load %arg8[%c0_13, %c0_14] : memref<1x1xf32, #tpu.memory_space<vmem>>, vector<1x1xf32>
    tpu.vector_store %arg8[%c0_13, %c0_14], %30 {strides = array<i32>} : memref<1x1xf32, #tpu.memory_space<vmem>>, vector<1x1xf32>,
    %c0_15 = arith.constant 0 : index
    %32 = memref.load %arg0[%c0_15] : memref<1xf32, #tpu.memory_space<smem>>
    %33 = vector.broadcast %32 : f32 to vector<1x1xf32>
    %34 = arith.divf %33, %30 : vector<1x1xf32>
    %c0_16 = arith.constant 0 : index
    %c0_17 = arith.constant 0 : index
    %35 = vector.load %arg2[%c0_16, %c0_17] : memref<8x32xf32, #tpu.memory_space<vmem>>, vector<8x32xf32>
    %cst_18 = arith.constant dense<0.000000e+00> : vector<8x16xf32>
    %36 = tpu.matmul %35, %0, %cst_18 {dimension_numbers = #tpu.dot_dimension_numbers<[1], [1], [0], [0], [0, 0, 1, 0], [], []>} : vector<8x32xf32>, vector<16x32xf32>, vector<8x16xf32> -> vector<8x16xf32>
    %37 = vector.broadcast %34 : vector<1x1xf32> to vector<8x16xf32>
    %38 = arith.mulf %37, %36 : vector<8x16xf32>
    %c0_19 = arith.constant 0 : index
    %c0_20 = arith.constant 0 : index
    %39 = vector.load %arg4[%c0_19, %c0_20] : memref<1x16xf32, #tpu.memory_space<vmem>>, vector<1x16xf32>
    %40 = vector.broadcast %39 : vector<1x16xf32> to vector<8x16xf32>
    %41 = arith.addf %38, %40 : vector<8x16xf32>
    %c0_21 = arith.constant 0 : index
    %c0_22 = arith.constant 0 : index
    %42 = vector.load %arg5[%c0_21, %c0_22] : memref<8x16xf32, #tpu.memory_space<vmem>>, vector<8x16xf32>
    tpu.vector_store %arg5[%c0_21, %c0_22], %41 {strides = array<i32>} : memref<8x16xf32, #tpu.memory_space<vmem>>, vector<8x16xf32>,
    return
  }
}

</mosaic_0001>

<llo_original>
// kernel: spectral_norm_linear.1
$region0: #{spectral_norm_linear.1}
  #allocation0 [shape = 'u32[]', space=smem, size = 0x4, offset = 0x4, fixed_abs, tag = 'smem constant byte address 0x4 - core index']
  #allocation1 [shape = 'u32[144,128]{1,0:T(1,128)}', space=vmem, size = 0x12000, scoped, tag = 'internal scratch']
  #allocation2 [shape = 'f32[1]{0:T(128)S(6)}', space=smem, size = 0x200, scoped, tag = 'scoped memory for spectral_norm_linear.1']
  %s0 = inlined_call_operand.<no memory space> [shape: f32[1], index: 0, kind: input, shape index: {}]
  %s1 = inlined_call_operand.vmem [shape: f32[1,16], index: 1, kind: input, shape index: {}]
  %s2 = inlined_call_operand.vmem [shape: f32[8,32], index: 2, kind: input, shape index: {}]
  %s3 = inlined_call_operand.vmem [shape: f32[16,32], index: 3, kind: input, shape index: {}]
  %s4 = inlined_call_operand.vmem [shape: f32[1,16], index: 4, kind: input, shape index: {}]
  %s5 = inlined_call_operand.hbm [shape: f32[8,16], index: 5, kind: output, shape index: {0}]
  %s6 = inlined_call_operand.hbm [shape: f32[1,16], index: 6, kind: output, shape index: {1}]
  %s7 = inlined_call_operand.hbm [shape: f32[1,32], index: 7, kind: output, shape index: {2}]
  %s8 = inlined_call_operand.hbm [shape: f32[1,1], index: 8, kind: output, shape index: {3}]
  %9 = xla_tuple %s5, %s6, %s7, %s8
  %s10 = sld [smem:[#allocation0]]
  $region54: #{spectral_norm_linear.1} parent=0
    _
  %s12 = ssub.s32 1, %s10
  %s13 = scalar_select 0, %s12, %s10
  %14 = sst [smem:[#allocation2]] %s0
  $region1: #{spectral_norm_linear.1} parent=0
    #allocation3 [shape = 'u8[4096]{0}', space=vmem, size = 0x1000, scoped, tag = 'output window, operand 0, single buffered']
    #allocation4 [shape = 's32[1]{0}', space=sflag, size = 0x4, scoped, tag = 'scoped memory for spectral_norm_linear.1']
    #allocation5 [shape = 'u8[512]{0}', space=vmem, size = 0x400, scoped, tag = 'output window, operand 1, single buffered']
    #allocation6 [shape = 's32[1]{0}', space=sflag, size = 0x4, scoped, tag = 'scoped memory for spectral_norm_linear.1']
    #allocation7 [shape = 'u8[512]{0}', space=vmem, size = 0x400, scoped, tag = 'output window, operand 2, single buffered']
    #allocation8 [shape = 'u8[512]{0}', space=vmem, size = 0x400, scoped, tag = 'output window, operand 3, single buffered']
    #allocation9 [shape = 's32[1]{0}', space=sflag, size = 0x4, scoped, tag = 'scoped memory for spectral_norm_linear.1']
    %15 = vsyncpa [#allocation4], 0
    %16 = vsyncpa [#allocation6], 0
    %17 = vsyncpa [#allocation9], 0
    // Predicated region
    $region2: #{spectral_norm_linear.1} parent=1 // pred_check
      _
    $region3: #{spectral_norm_linear.1} parent=1 // pred_check_branch
      %19 = sbr.rel (0) target = $region5
    $region4: #{spectral_norm_linear.1} parent=1 // pred_region
      _
    $region5: #{spectral_norm_linear.1} parent=1 // pred_fallthru
      _
    // Predicated region
    $region6: #{spectral_norm_linear.1} parent=1 // pred_check
      _
    $region7: #{spectral_norm_linear.1} parent=1 // pred_check_branch
      %21 = sbr.rel (0) target = $region9
    $region8: #{spectral_norm_linear.1} parent=1 // pred_region
      _
    $region9: #{spectral_norm_linear.1} parent=1 // pred_fallthru
      _
    // Predicated region
    $region10: #{spectral_norm_linear.1} parent=1 // pred_check
      _
    $region11: #{spectral_norm_linear.1} parent=1 // pred_check_branch
      %23 = sbr.rel (0) target = $region13
    $region12: #{spectral_norm_linear.1} parent=1 // pred_region
      _
    $region13: #{spectral_norm_linear.1} parent=1 // pred_fallthru
      _
    // Predicated region
    $region14: #{spectral_norm_linear.1} parent=1 // pred_check
      _
    $region15: #{spectral_norm_linear.1} parent=1 // pred_check_branch
      %25 = sbr.rel (0) target = $region17
    $region16: #{spectral_norm_linear.1} parent=1 // pred_region
      _
    $region17: #{spectral_norm_linear.1} parent=1 // pred_fallthru
      _
    // Predicated region
    $region18: #{spectral_norm_linear.1} parent=1 // pred_check
      _
    $region19: #{spectral_norm_linear.1} parent=1 // pred_check_branch
      %27 = sbr.rel (0) target = $region21
    $region20: #{spectral_norm_linear.1} parent=1 // pred_region
      _
    $region21: #{spectral_norm_linear.1} parent=1 // pred_fallthru
      _
    %v28 = vld [vmem:[%s3] sm:$0xff]
    %v29 = vld [vmem:[%s3 + $0x8] sm:$0xff]
    %v30 = vld [vmem:[%s1] sm:$0x1]
    %vm31 = vcmask 130048
    %v33 = vsel %vm31, %v30, 0
    %35 = vmatprep.subr.mxu0 0.0
    %36 = vmatpush1.msra.mxu0 %v28
    %37 = vmatprep.subr.mxu0 0.0
    %38 = vmatpush1.msra.mxu0 %v29
    %39 = vmatprep.subr.mxu0 0.0
    %40 = vmatpush1.msra.mxu0 0.0
    %41 = vmatprep.subr.mxu0 0.0
    %42 = vmatpush1.msra.mxu0 0.0
    %43 = vmatprep.subr.mxu0 0.0
    %44 = vmatpush1.msra.mxu0 0.0
    %45 = vmatprep.subr.mxu0 0.0
    %46 = vmatpush1.msra.mxu0 0.0
    %47 = vmatprep.subr.mxu0 0.0
    %48 = vmatpush1.msra.mxu0 0.0
    %49 = vmatprep.subr.mxu0 0.0
    %50 = vmatpush1.msra.mxu0 0.0
    %51 = vmatprep.subr.mxu0 0.0
    %52 = vmatpush1.msra.mxu0 0.0
    %53 = vmatprep.subr.mxu0 0.0
    %54 = vmatpush1.msra.mxu0 0.0
    %55 = vmatprep.subr.mxu0 0.0
    %56 = vmatpush1.msra.mxu0 0.0
    %57 = vmatprep.subr.mxu0 0.0
    %58 = vmatpush1.msra.mxu0 0.0
    %59 = vmatprep.subr.mxu0 0.0
    %60 = vmatpush1.msra.mxu0 0.0
    %61 = vmatprep.subr.mxu0 0.0
    %62 = vmatpush1.msra.mxu0 0.0
    %63 = vmatprep.subr.mxu0 0.0
    %64 = vmatpush1.msra.mxu0 0.0
    %65 = vmatprep.subr.mxu0 0.0
    %66 = vmatpush1.msra.mxu0 0.0
    %67 = vmatprep.subr.mxu0 0.0
    %68 = vmatpush1.msra.mxu0 0.0
    %69 = vmatprep.subr.mxu0 0.0
    %70 = vmatpush1.msra.mxu0 0.0
    %71 = vmatprep.subr.mxu0 0.0
    %72 = vmatpush1.msra.mxu0 0.0
    %73 = vmatprep.subr.mxu0 0.0
    %74 = vmatpush1.msra.mxu0 0.0
    %75 = vmatprep.subr.mxu0 0.0
    %76 = vmatpush1.msra.mxu0 0.0
    %77 = vmatprep.subr.mxu0 0.0
    %78 = vmatpush1.msra.mxu0 0.0
    %79 = vmatprep.subr.mxu0 0.0
    %80 = vmatpush1.msra.mxu0 0.0
    %81 = vmatprep.subr.mxu0 0.0
    %82 = vmatpush1.msra.mxu0 0.0
    %83 = vmatprep.subr.mxu0 0.0
    %84 = vmatpush1.msra.mxu0 0.0
    %85 = vmatprep.subr.mxu0 0.0
    %86 = vmatpush1.msra.mxu0 0.0
    %87 = vmatprep.subr.mxu0 0.0
    %88 = vmatpush1.msra.mxu0 0.0
    %89 = vmatprep.subr.mxu0 0.0
    %90 = vmatpush1.msra.mxu0 0.0
    %91 = vmatprep.subr.mxu0 0.0
    %92 = vmatpush1.msra.mxu0 0.0
    %93 = vmatprep.subr.mxu0 0.0
    %94 = vmatpush1.msra.mxu0 0.0
    %95 = vmatprep.subr.mxu0 0.0
    %96 = vmatpush1.msra.mxu0 0.0
    %97 = vmatprep.subr.mxu0 0.0
    %98 = vmatpush1.msra.mxu0 0.0
    %99 = vmatprep.mubr.f32.mxu0 0.0
    %100 = vmatmul.mubr.f32.gmra.mrb[0].mxu0 %v33
    %v101 = vpop.f32.mrb[0].mxu0
    %v102 = vadd.f32 0.0, %v101
    %v103 = vpop.f32.mrb[0].mxu0
    %104 = vdwg.mxu0
    %v105 = vmul.f32 %v102, %v102
    %vm106 = vcmask 253952
    %v107 = vsel %vm106, %v105, 0.0
    %108 = vadd.xlane.f32.xlu0 %v107
    %v109 = vpop.xlane.xlu0 %108
    %v110 = vrot.slane %v109, 4
    %v111 = vadd.f32 %v109, %v110
    %v112 = vrot.slane %v111, 2
    %v113 = vadd.f32 %v111, %v112
    %v114 = vrot.slane %v113, 1
    %v115 = vadd.f32 %v113, %v114
    %s116 = vtos %v115
    %v117 = vstv %s116
    %v118 = vrsqrt.pop %v117
    %v119 = vmul.f32 %v117, %v118
    %vm120 = vcmp.eq.f32.partialorder %v117, inf
    %v121 = vsel %vm120, %v117, %v119
    %vm122 = vcmp.eq.f32.partialorder %v117, 0.0
    %v123 = vand.u32 %v117, 2147483648
    %v124 = vsel %vm122, %v123, %v121
    %v125 = vadd.f32 %v124, 1e-12
    %v126 = vrcp.pop %v125
    %v127 = vmul.f32 %v102, %v126
    %128 = vst.msk [vmem:[#allocation7] sm:$0x1] %vm106, %v127
    %vm129 = vcmask 261120
    %v131 = vsel %vm129, %v127, 0
    %v134 = vsel %vm129, %v28, 0
    %v137 = vsel %vm129, %v29, 0
    %139 = vmatprep.subr.mxu0 0.0
    %140 = vmatpush1.xpose.msra.mxu0 %v134
    %141 = vmatprep.subr.mxu0 0.0
    %142 = vmatpush1.xpose.msra.mxu0 %v137
    %143 = vmatprep.subr.mxu0 0.0
    %144 = vmatpush1.xpose.msra.mxu0 0.0
    %145 = vmatprep.subr.mxu0 0.0
    %146 = vmatpush1.xpose.msra.mxu0 0.0
    %147 = vmatprep.subr.mxu0 0.0
    %148 = vmatpush1.xpose.msra.mxu0 0.0
    %149 = vmatprep.subr.mxu0 0.0
    %150 = vmatpush1.xpose.msra.mxu0 0.0
    %151 = vmatprep.subr.mxu0 0.0
    %152 = vmatpush1.xpose.msra.mxu0 0.0
    %153 = vmatprep.subr.mxu0 0.0
    %154 = vmatpush1.xpose.msra.mxu0 0.0
    %155 = vmatprep.subr.mxu0 0.0
    %156 = vmatpush1.xpose.msra.mxu0 0.0
    %157 = vmatprep.subr.mxu0 0.0
    %158 = vmatpush1.xpose.msra.mxu0 0.0
    %159 = vmatprep.subr.mxu0 0.0
    %160 = vmatpush1.xpose.msra.mxu0 0.0
    %161 = vmatprep.subr.mxu0 0.0
    %162 = vmatpush1.xpose.msra.mxu0 0.0
    %163 = vmatprep.subr.mxu0 0.0
    %164 = vmatpush1.xpose.msra.mxu0 0.0
    %165 = vmatprep.subr.mxu0 0.0
    %166 = vmatpush1.xpose.msra.mxu0 0.0
    %167 = vmatprep.subr.mxu0 0.0
    %168 = vmatpush1.xpose.msra.mxu0 0.0
    %169 = vmatprep.subr.mxu0 0.0
    %170 = vmatpush1.xpose.msra.mxu0 0.0
    %171 = vmatprep.subr.mxu0 0.0
    %172 = vmatpush1.xpose.msra.mxu0 0.0
    %173 = vmatprep.subr.mxu0 0.0
    %174 = vmatpush1.xpose.msra.mxu0 0.0
    %175 = vmatprep.subr.mxu0 0.0
    %176 = vmatpush1.xpose.msra.mxu0 0.0
    %177 = vmatprep.subr.mxu0 0.0
    %178 = vmatpush1.xpose.msra.mxu0 0.0
    %179 = vmatprep.subr.mxu0 0.0
    %180 = vmatpush1.xpose.msra.mxu0 0.0
    %181 = vmatprep.subr.mxu0 0.0
    %182 = vmatpush1.xpose.msra.mxu0 0.0
    %183 = vmatprep.subr.mxu0 0.0
    %184 = vmatpush1.xpose.msra.mxu0 0.0
    %185 = vmatprep.subr.mxu0 0.0
    %186 = vmatpush1.xpose.msra.mxu0 0.0
    %187 = vmatprep.subr.mxu0 0.0
    %188 = vmatpush1.xpose.msra.mxu0 0.0
    %189 = vmatprep.subr.mxu0 0.0
    %190 = vmatpush1.xpose.msra.mxu0 0.0
    %191 = vmatprep.subr.mxu0 0.0
    %192 = vmatpush1.xpose.msra.mxu0 0.0
    %193 = vmatprep.subr.mxu0 0.0
    %194 = vmatpush1.xpose.msra.mxu0 0.0
    %195 = vmatprep.subr.mxu0 0.0
    %196 = vmatpush1.xpose.msra.mxu0 0.0
    %197 = vmatprep.subr.mxu0 0.0
    %198 = vmatpush1.xpose.msra.mxu0 0.0
    %199 = vmatprep.subr.mxu0 0.0
    %200 = vmatpush1.xpose.msra.mxu0 0.0
    %201 = vmatprep.subr.mxu0 0.0
    %202 = vmatpush1.xpose.msra.mxu0 0.0
    %203 = vmatprep.mubr.f32.mxu0 0.0
    %204 = vmatmul.mubr.f32.gmra.mrb[0].mxu0 %v131
    %v205 = vpop.f32.mrb[0].mxu0
    %v206 = vadd.f32 0.0, %v205
    %v207 = vpop.f32.mrb[0].mxu0
    %208 = vdwg.mxu0
    %v209 = vmul.f32 %v206, %v206
    %vm210 = vcmask 122880
    %v211 = vsel %vm210, %v209, 0.0
    %212 = vadd.xlane.f32.xlu0 %v211
    %v213 = vpop.xlane.xlu0 %212
    %v214 = vrot.slane %v213, 4
    %v215 = vadd.f32 %v213, %v214
    %v216 = vrot.slane %v215, 2
    %v217 = vadd.f32 %v215, %v216
    %v218 = vrot.slane %v217, 1
    %v219 = vadd.f32 %v217, %v218
    %s220 = vtos %v219
    %v221 = vstv %s220
    %v222 = vrsqrt.pop %v221
    %v223 = vmul.f32 %v221, %v222
    %vm224 = vcmp.eq.f32.partialorder %v221, inf
    %v225 = vsel %vm224, %v221, %v223
    %vm226 = vcmp.eq.f32.partialorder %v221, 0.0
    %v227 = vand.u32 %v221, 2147483648
    %v228 = vsel %vm226, %v227, %v225
    %v229 = vadd.f32 %v228, 1e-12
    %v230 = vrcp.pop %v229
    %v231 = vmul.f32 1.0, %v230
    %v232 = vmul.f32 %v206, %v231
    %233 = vst.msk [vmem:[#allocation5] sm:$0x1] %vm210, %v232
    %v234 = vmul.f32 %v221, %v231
    %vm235 = vcmask 0
    %236 = vst.msk [vmem:[#allocation8] sm:$0x1] %vm235, %v234
    %s237 = sld [smem:[#allocation2]]
    %v238 = vstv %s237
    %v239 = vrcp.pop %v234
    %v240 = vmul.f32 %v238, %v239
    %v241 = vld [vmem:[%s2] sm:$0xff]
    %v243 = vsel %vm129, %v241, 0
    %245 = vmatprep.subr.mxu0 0.0
    %246 = vmatpush1.xpose.msra.mxu0 %v134
    %247 = vmatprep.subr.mxu0 0.0
    %248 = vmatpush1.xpose.msra.mxu0 %v137
    %249 = vmatprep.subr.mxu0 0.0
    %250 = vmatpush1.xpose.msra.mxu0 0.0
    %251 = vmatprep.subr.mxu0 0.0
    %252 = vmatpush1.xpose.msra.mxu0 0.0
    %253 = vmatprep.subr.mxu0 0.0
    %254 = vmatpush1.xpose.msra.mxu0 0.0
    %255 = vmatprep.subr.mxu0 0.0
    %256 = vmatpush1.xpose.msra.mxu0 0.0
    %257 = vmatprep.subr.mxu0 0.0
    %258 = vmatpush1.xpose.msra.mxu0 0.0
    %259 = vmatprep.subr.mxu0 0.0
    %260 = vmatpush1.xpose.msra.mxu0 0.0
    %261 = vmatprep.subr.mxu0 0.0
    %262 = vmatpush1.xpose.msra.mxu0 0.0
    %263 = vmatprep.subr.mxu0 0.0
    %264 = vmatpush1.xpose.msra.mxu0 0.0
    %265 = vmatprep.subr.mxu0 0.0
    %266 = vmatpush1.xpose.msra.mxu0 0.0
    %267 = vmatprep.subr.mxu0 0.0
    %268 = vmatpush1.xpose.msra.mxu0 0.0
    %269 = vmatprep.subr.mxu0 0.0
    %270 = vmatpush1.xpose.msra.mxu0 0.0
    %271 = vmatprep.subr.mxu0 0.0
    %272 = vmatpush1.xpose.msra.mxu0 0.0
    %273 = vmatprep.subr.mxu0 0.0
    %274 = vmatpush1.xpose.msra.mxu0 0.0
    %275 = vmatprep.subr.mxu0 0.0
    %276 = vmatpush1.xpose.msra.mxu0 0.0
    %277 = vmatprep.subr.mxu0 0.0
    %278 = vmatpush1.xpose.msra.mxu0 0.0
    %279 = vmatprep.subr.mxu0 0.0
    %280 = vmatpush1.xpose.msra.mxu0 0.0
    %281 = vmatprep.subr.mxu0 0.0
    %282 = vmatpush1.xpose.msra.mxu0 0.0
    %283 = vmatprep.subr.mxu0 0.0
    %284 = vmatpush1.xpose.msra.mxu0 0.0
    %285 = vmatprep.subr.mxu0 0.0
    %286 = vmatpush1.xpose.msra.mxu0 0.0
    %287 = vmatprep.subr.mxu0 0.0
    %288 = vmatpush1.xpose.msra.mxu0 0.0
    %289 = vmatprep.subr.mxu0 0.0
    %290 = vmatpush1.xpose.msra.mxu0 0.0
    %291 = vmatprep.subr.mxu0 0.0
    %292 = vmatpush1.xpose.msra.mxu0 0.0
    %293 = vmatprep.subr.mxu0 0.0
    %294 = vmatpush1.xpose.msra.mxu0 0.0
    %295 = vmatprep.subr.mxu0 0.0
    %296 = vmatpush1.xpose.msra.mxu0 0.0
    %297 = vmatprep.subr.mxu0 0.0
    %298 = vmatpush1.xpose.msra.mxu0 0.0
    %299 = vmatprep.subr.mxu0 0.0
    %300 = vmatpush1.xpose.msra.mxu0 0.0
    %301 = vmatprep.subr.mxu0 0.0
    %302 = vmatpush1.xpose.msra.mxu0 0.0
    %303 = vmatprep.subr.mxu0 0.0
    %304 = vmatpush1.xpose.msra.mxu0 0.0
    %305 = vmatprep.subr.mxu0 0.0
    %306 = vmatpush1.xpose.msra.mxu0 0.0
    %307 = vmatprep.subr.mxu0 0.0
    %308 = vmatpush1.xpose.msra.mxu0 0.0
    %309 = vmatprep.mubr.f32.mxu0 0.0
    %310 = vmatmul.mubr.f32.gmra.mrb[0].mxu0 %v243
    %v311 = vpop.f32.mrb[0].mxu0
    %v312 = vadd.f32 0.0, %v311
    %v313 = vpop.f32.mrb[0].mxu0
    %314 = vdwg.mxu0
    %v315 = vmul.f32 %v240, %v312
    %v316 = vld [vmem:[%s4] sm:$0x1]
    %v318 = vlaneseq
    %v319 = vshrl.u32 %v318, 7
    %v320 = vsub.s32 0, %v319
    %v321 = vrot.slane %v316, %v320
    %v323 = vadd.f32 %v315, %v321
    %324 = vst.msk [vmem:[#allocation3] sm:$0xff] %vm31, %v323
    // Predicated region
    $region22: #{spectral_norm_linear.1} parent=1 // pred_check
      _
    $region23: #{spectral_norm_linear.1} parent=1 // pred_check_branch
      %326 = sbr.rel (0) target = $region25
    $region24: #{spectral_norm_linear.1} parent=1 // pred_region
      %s328 = ssub.s32 128, 128
      %329 = vsyncadd [#allocation4], %s328
      %s331 = sshll.u32 [#allocation3], 4
      %s332 = int_to_ptr.vmem [resolvable:$true] %s331
      %334 = dma.vmem_to_hbm [thread:$0]  %s332, 128, %s5, [#allocation4]
    $region25: #{spectral_norm_linear.1} parent=1 // pred_fallthru
      _
    // Predicated region
    $region26: #{spectral_norm_linear.1} parent=1 // pred_check
      _
    $region27: #{spectral_norm_linear.1} parent=1 // pred_check_branch
      %336 = sbr.rel (0) target = $region29
    $region28: #{spectral_norm_linear.1} parent=1 // pred_region
      %s338 = ssub.s32 16, 16
      %339 = vsyncadd [#allocation6], %s338
      %s341 = sshll.u32 [#allocation5], 4
      %s342 = int_to_ptr.vmem [resolvable:$true] %s341
      %344 = dma.vmem_to_hbm [thread:$0]  %s342, 16, %s6, [#allocation6]
    $region29: #{spectral_norm_linear.1} parent=1 // pred_fallthru
      _
    // Predicated region
    $region30: #{spectral_norm_linear.1} parent=1 // pred_check
      _
    $region31: #{spectral_norm_linear.1} parent=1 // pred_check_branch
      %346 = sbr.rel (0) target = $region33
    $region32: #{spectral_norm_linear.1} parent=1 // pred_region
      %s348 = ssub.s32 16, 16
      %349 = vsyncadd [#allocation6], %s348
      %s351 = sshll.u32 [#allocation7], 4
      %s352 = int_to_ptr.vmem [resolvable:$true] %s351
      %354 = dma.vmem_to_hbm [thread:$0]  %s352, 16, %s7, [#allocation6]
    $region33: #{spectral_norm_linear.1} parent=1 // pred_fallthru
      _
    // Predicated region
    $region34: #{spectral_norm_linear.1} parent=1 // pred_check
      _
    $region35: #{spectral_norm_linear.1} parent=1 // pred_check_branch
      %356 = sbr.rel (0) target = $region37
    $region36: #{spectral_norm_linear.1} parent=1 // pred_region
      %s358 = ssub.s32 16, 16
      %359 = vsyncadd [#allocation9], %s358
      %s361 = sshll.u32 [#allocation8], 4
      %s362 = int_to_ptr.vmem [resolvable:$true] %s361
      %364 = dma.vmem_to_hbm [thread:$0]  %s362, 16, %s8, [#allocation9]
    $region37: #{spectral_norm_linear.1} parent=1 // pred_fallthru
      _
    // Predicated region
    $region38: #{spectral_norm_linear.1} parent=1 // pred_check
      _
    $region39: #{spectral_norm_linear.1} parent=1 // pred_check_branch
      %366 = sbr.rel (0) target = $region41
    $region40: #{spectral_norm_linear.1} parent=1 // pred_region
      %367 = dma.done [#allocation4], 128
    $region41: #{spectral_norm_linear.1} parent=1 // pred_fallthru
      _
    // Predicated region
    $region42: #{spectral_norm_linear.1} parent=1 // pred_check
      _
    $region43: #{spectral_norm_linear.1} parent=1 // pred_check_branch
      %369 = sbr.rel (0) target = $region45
    $region44: #{spectral_norm_linear.1} parent=1 // pred_region
      %370 = dma.done [#allocation6], 16
    $region45: #{spectral_norm_linear.1} parent=1 // pred_fallthru
      _
    // Predicated region
    $region46: #{spectral_norm_linear.1} parent=1 // pred_check
      _
    $region47: #{spectral_norm_linear.1} parent=1 // pred_check_branch
      %372 = sbr.rel (0) target = $region49
    $region48: #{spectral_norm_linear.1} parent=1 // pred_region
      %373 = dma.done [#allocation6], 16
    $region49: #{spectral_norm_linear.1} parent=1 // pred_fallthru
      _
    // Predicated region
    $region50: #{spectral_norm_linear.1} parent=1 // pred_check
      _
    $region51: #{spectral_norm_linear.1} parent=1 // pred_check_branch
      %375 = sbr.rel (0) target = $region53
    $region52: #{spectral_norm_linear.1} parent=1 // pred_region
      %376 = dma.done [#allocation9], 16
    $region53: #{spectral_norm_linear.1} parent=1 // pred_fallthru
      _
    %377 = vsyncpa [#allocation4], 1
    %378 = vsyncpa [#allocation6], 1
    %379 = vsyncpa [#allocation9], 1

</llo_original>
